<compile_context>
chip_gen: v6e
topology: v6e:2x2x1
jax: 0.10.0
libtpu: 0.0.40
codegen_flags: <defaults>
</compile_context>

<pallas_src>
from typing import NamedTuple

import jax
import jax.numpy as jnp
from jax.experimental import pallas as pl
from jax.experimental.pallas import tpu as pltpu

_MIB = 1024 * 1024
_LANE = 128
_SUBLANE = 8
# Conservative working-set target: fits v5e/v6e physical VMEM comfortably and
# v7x's 64 MiB per-TensorCore VMEM with headroom.
_VMEM_BUDGET = 40 * _MIB


def _round_up(v, m):
    return ((v + m - 1) // m) * m


def _cdiv(a, b):
    return (a + b - 1) // b


# --------------------------------------------------------------------------- #
# Kernel body: one [TM, K] x [K, TN] tile on the MXU, f32 accumulation.
# --------------------------------------------------------------------------- #
def _linear_kernel(x_ref, w_ref, b_ref, o_ref):
    # x_ref: [TM, K], w_ref: [K, TN] (canonical MXU layout, transposed once at
    # parameter-prep time), b_ref: [1, TN], o_ref: [TM, TN].
    acc = jnp.dot(x_ref[...], w_ref[...], preferred_element_type=jnp.float32)
    o_ref[...] = (acc + b_ref[...].astype(jnp.float32)).astype(o_ref.dtype)


# --------------------------------------------------------------------------- #
# One-time parameter preparation (NOT part of the per-call forward path).
# --------------------------------------------------------------------------- #
class MLPHeadParams(NamedTuple):
    w_kn: jax.Array      # [in_features, n_pad]  transposed + lane-padded once
    b_row: jax.Array     # [1, n_pad]
    num_classes: int     # true (unpadded) class count


def prepare_mlp_head_params(weight, bias, *, param_dtype=None):
    """Prepare nn.Linear params once: transpose to [K, N], pad N to 128 lanes.

    weight: [num_classes, in_features]  (PyTorch layout)
    bias:   [num_classes]
    param_dtype: optionally store params in bf16 to halve weight HBM traffic
                 (kernel still accumulates in f32 on the MXU).
    """
    num_classes, in_features = weight.shape
    if param_dtype is not None:
        weight = weight.astype(param_dtype)
        bias = bias.astype(param_dtype)
    n_pad = _round_up(num_classes, _LANE)
    w_kn = jnp.pad(weight.T, ((0, 0), (0, n_pad - num_classes)))
    b_row = jnp.pad(bias, (0, n_pad - num_classes)).reshape(1, n_pad)
    return MLPHeadParams(w_kn=w_kn, b_row=b_row, num_classes=num_classes)


# --------------------------------------------------------------------------- #
# Tiling / VMEM budgeting.
# --------------------------------------------------------------------------- #
def _choose_tiles(B, K, n_pad, x_itemsize, w_itemsize, o_itemsize, tm_max):
    # Batch tile: bound padding waste to < n_b_tiles * 8 rows instead of up to
    # tm_max - 1 rows (e.g. B=260 -> 2 tiles of 136, not one pad to 512).
    n_b_tiles = _cdiv(B, tm_max)
    TM = _round_up(_cdiv(B, n_b_tiles), _SUBLANE)
    b_pad = n_b_tiles * TM

    # Class tile: keep the whole weight resident (single N tile) when it fits
    # the VMEM budget; otherwise tile N so a double-buffered (K, TN) weight
    # block plus the streamed in/out tiles fit.
    x_bytes = 3 * TM * K * x_itemsize            # up to 3-deep input pipeline
    budget = _VMEM_BUDGET - x_bytes
    resident_bytes = K * n_pad * w_itemsize + 2 * TM * n_pad * o_itemsize
    if resident_bytes <= budget:
        TN = n_pad
    else:
        per_lane_unit = 2 * K * _LANE * w_itemsize + 2 * TM * _LANE * o_itemsize
        units = max(1, budget // per_lane_unit)
        units = min(units, n_pad // _LANE)
        while (n_pad // _LANE) % units:          # TN must divide n_pad
            units -= 1
        TN = units * _LANE
    return TM, b_pad, TN


def _vmem_limit_bytes(TM, K, TN, n_tiles, x_itemsize, w_itemsize, o_itemsize,
                      single_buffer_resident):
    w_bufs = 1 if (n_tiles == 1 and single_buffer_resident) else 2
    total = (3 * TM * K * x_itemsize           # x tiles (up to Buffered(3))
             + w_bufs * K * TN * w_itemsize    # weight block(s)
             + w_bufs * TN * w_itemsize        # bias block(s)
             + 2 * TM * TN * o_itemsize)       # output tiles
    # Never below the 32 MiB default scoped limit; cap at v7x's 64 MiB per TC.
    return int(min(64 * _MIB, max(32 * _MIB, total + 8 * _MIB)))


def _build_call(b_pad, n_pad, K, TM, TN, x_dtype, w_dtype, b_dtype, o_dtype,
                use_pipeline_modes):
    n_tiles = n_pad // TN
    b_tiles = b_pad // TM
    grid = (n_tiles, b_tiles)   # batch innermost: weight tile fetched once/N tile

    x_itemsize = jnp.dtype(x_dtype).itemsize
    w_itemsize = jnp.dtype(w_dtype).itemsize
    o_itemsize = jnp.dtype(o_dtype).itemsize

    x_mode = w_mode = b_mode = None
    if use_pipeline_modes:
        if n_tiles == 1:
            # Constant index_map -> one buffer is enough; halves weight VMEM.
            w_mode = pl.Buffered(1)
            b_mode = pl.Buffered(1)
        if TN <= 512 and b_tiles > 1:
            # Short per-step matmul: deepen x pipeline so the TMxK DMA stays hidden.
            x_mode = pl.Buffered(3)

    def spec(shape, index_map, mode):
        if mode is None:
            return pl.BlockSpec(shape, index_map)
        return pl.BlockSpec(shape, index_map, pipeline_mode=mode)

    in_specs = [
        spec((TM, K), lambda n, b: (b, 0), x_mode),   # x: streamed batch tiles
        spec((K, TN), lambda n, b: (0, n), w_mode),   # weight: per-N-tile / resident
        spec((1, TN), lambda n, b: (0, n), b_mode),   # bias
    ]
    out_specs = pl.BlockSpec((TM, TN), lambda n, b: (b, n))

    cost = pl.CostEstimate(
        flops=2 * b_pad * K * n_pad,
        transcendentals=0,
        bytes_accessed=(n_tiles * b_pad * K * x_itemsize   # x re-read per N tile
                        + K * n_pad * w_itemsize
                        + n_pad * jnp.dtype(b_dtype).itemsize
                        + b_pad * n_pad * o_itemsize),
    )

    return pl.pallas_call(
        _linear_kernel,
        out_shape=jax.ShapeDtypeStruct((b_pad, n_pad), o_dtype),
        grid_spec=pl.GridSpec(grid=grid, in_specs=in_specs, out_specs=out_specs),
        compiler_params=pltpu.CompilerParams(
            # Both axes independent (no reduction): megacore may shard either;
            # for single-batch-tile inference on v7x the split lands on classes.
            dimension_semantics=("parallel", "parallel"),
            vmem_limit_bytes=_vmem_limit_bytes(
                TM, K, TN, n_tiles, x_itemsize, w_itemsize, o_itemsize,
                single_buffer_resident=use_pipeline_modes),
        ),
        cost_estimate=cost,
    )


# --------------------------------------------------------------------------- #
# Forward pass: y = x @ weight.T + bias  (PyTorch nn.Linear semantics).
# --------------------------------------------------------------------------- #
def mlp_head_forward(x, params: MLPHeadParams, *, tm_max=256):
    B, K = x.shape
    Kw, n_pad = params.w_kn.shape
    assert K == Kw, "in_features mismatch between x and prepared params"
    o_dtype = x.dtype

    TM, b_pad, TN = _choose_tiles(
        B, K, n_pad,
        jnp.dtype(x.dtype).itemsize,
        jnp.dtype(params.w_kn.dtype).itemsize,
        jnp.dtype(o_dtype).itemsize,
        tm_max,
    )
    x_p = x if b_pad == B else jnp.pad(x, ((0, b_pad - B), (0, 0)))

    def run(use_pipeline_modes):
        call = _build_call(b_pad, n_pad, K, TM, TN,
                           x.dtype, params.w_kn.dtype, params.b_row.dtype,
                           o_dtype, use_pipeline_modes)
        return call(x_p, params.w_kn, params.b_row)

    try:
        out = run(True)
    except Exception:
        # pl.Buffered pipeline tuning is an optimization only; fall back to
        # default double-buffering if this JAX/Mosaic build rejects it.
        out = run(False)

    # Slice off batch padding and the lane padding of the class dim.
    return out[:B, :params.num_classes]


if __name__ == "__main__":
    key = jax.random.PRNGKey(0)
    k_x, k_w, k_b = jax.random.split(key, 3)

    B = 8
    in_features = 32
    num_classes = 16

    x = jax.random.normal(k_x, (B, in_features), dtype=jnp.float32)
    # Synthetic params with nn.Linear(in_features, num_classes) shapes.
    weight = jax.random.normal(k_w, (num_classes, in_features), dtype=jnp.float32) * 0.05
    bias = jax.random.normal(k_b, (num_classes,), dtype=jnp.float32) * 0.05

    # One-time parameter prep (transpose to [K, N] + lane pad) -- not per call.
    params = prepare_mlp_head_params(weight, bias)
    y = jax.block_until_ready(mlp_head_forward(x, params))

    y_ref = x @ weight.T + bias
    assert y.shape == (B, num_classes)
    assert jnp.allclose(y, y_ref, atol=1e-5, rtol=1e-5)

    # Optional bf16-weight path (halves weight HBM traffic; f32 accumulation).
    params_bf16 = prepare_mlp_head_params(weight, bias, param_dtype=jnp.bfloat16)
    y_bf16 = jax.block_until_ready(
        mlp_head_forward(x.astype(jnp.bfloat16), params_bf16))
    assert jnp.allclose(y_bf16.astype(jnp.float32), y_ref, atol=5e-2, rtol=5e-2)

    print("KERNEL_OK")
</pallas_src>

<mosaic_0001>
module attributes {stable_mosaic.version = 11 : i64} {
  func.func @_linear_kernel(%arg0: i32, %arg1: i32, %arg2: memref<8x32xf32, #tpu.memory_space<vmem>>, %arg3: memref<32x128xf32, #tpu.memory_space<vmem>>, %arg4: memref<1x128xf32, #tpu.memory_space<vmem>>, %arg5: memref<8x128xf32, #tpu.memory_space<vmem>>) attributes {dimension_semantics = [#tpu.dimension_semantics<parallel>, #tpu.dimension_semantics<parallel>], iteration_bounds = array<i64: 1, 1>, scalar_prefetch = 0 : i64, scratch_operands = 0 : i64, tpu.core_type = #tpu.core_type<tc>, window_params = [{transform_indices = @transform_0, window_bounds = array<i64: 8, 32>}, {pipeline_mode = #tpu.pipeline_mode<synchronous>, transform_indices = @transform_1, window_bounds = array<i64: 32, 128>}, {pipeline_mode = #tpu.pipeline_mode<synchronous>, transform_indices = @transform_2, window_bounds = array<i64: 1, 128>}, {transform_indices = @transform_3, window_bounds = array<i64: 8, 128>}]} {
    %c0 = arith.constant 0 : index
    %c0_0 = arith.constant 0 : index
    %0 = vector.load %arg2[%c0, %c0_0] : memref<8x32xf32, #tpu.memory_space<vmem>>, vector<8x32xf32>
    %c0_1 = arith.constant 0 : index
    %c0_2 = arith.constant 0 : index
    %1 = vector.load %arg3[%c0_1, %c0_2] : memref<32x128xf32, #tpu.memory_space<vmem>>, vector<32x128xf32>
    %cst = arith.constant dense<0.000000e+00> : vector<8x128xf32>
    %2 = tpu.matmul %0, %1, %cst {dimension_numbers = #tpu.dot_dimension_numbers<[1], [0], [0], [1], [0, 0, 1, 1], [], []>} : vector<8x32xf32>, vector<32x128xf32>, vector<8x128xf32> -> vector<8x128xf32>
    %c0_3 = arith.constant 0 : index
    %c0_4 = arith.constant 0 : index
    %3 = vector.load %arg4[%c0_3, %c0_4] : memref<1x128xf32, #tpu.memory_space<vmem>>, vector<1x128xf32>
    %4 = vector.broadcast %3 : vector<1x128xf32> to vector<8x128xf32>
    %5 = arith.addf %2, %4 : vector<8x128xf32>
    %c0_5 = arith.constant 0 : index
    %c0_6 = arith.constant 0 : index
    %6 = vector.load %arg5[%c0_5, %c0_6] : memref<8x128xf32, #tpu.memory_space<vmem>>, vector<8x128xf32>
    tpu.vector_store %arg5[%c0_5, %c0_6], %5 {strides = array<i32>} : memref<8x128xf32, #tpu.memory_space<vmem>>, vector<8x128xf32>,
    return
  }
  func.func @transform_0(%arg0: i32, %arg1: i32) -> (i32, i32) {
    %c0_i32 = arith.constant 0 : i32
    %c0_i32_0 = arith.constant 0 : i32
    return %arg1, %c0_i32 : i32, i32
  }
  func.func @transform_1(%arg0: i32, %arg1: i32) -> (i32, i32) {
    %c0_i32 = arith.constant 0 : i32
    %c0_i32_0 = arith.constant 0 : i32
    return %c0_i32, %arg0 : i32, i32
  }
  func.func @transform_2(%arg0: i32, %arg1: i32) -> (i32, i32) {
    %c0_i32 = arith.constant 0 : i32
    %c0_i32_0 = arith.constant 0 : i32
    return %c0_i32, %arg0 : i32, i32
  }
  func.func @transform_3(%arg0: i32, %arg1: i32) -> (i32, i32) {
    %c0_i32 = arith.constant 0 : i32
    return %arg1, %arg0 : i32, i32
  }
}

module attributes {stable_mosaic.version = 11 : i64} {
  func.func @_linear_kernel(%arg0: i32, %arg1: i32, %arg2: memref<8x32xf32, #tpu.memory_space<vmem>>, %arg3: memref<32x128xf32, #tpu.memory_space<vmem>>, %arg4: memref<1x128xf32, #tpu.memory_space<vmem>>, %arg5: memref<8x128xf32, #tpu.memory_space<vmem>>) attributes {dimension_semantics = [#tpu.dimension_semantics<parallel>, #tpu.dimension_semantics<parallel>], iteration_bounds = array<i64: 1, 1>, scalar_prefetch = 0 : i64, scratch_operands = 0 : i64, tpu.core_type = #tpu.core_type<tc>, window_params = [{transform_indices = @transform_0, window_bounds = array<i64: 8, 32>}, {transform_indices = @transform_1, window_bounds = array<i64: 32, 128>}, {transform_indices = @transform_2, window_bounds = array<i64: 1, 128>}, {transform_indices = @transform_3, window_bounds = array<i64: 8, 128>}]} {
    %c0 = arith.constant 0 : index
    %c0_0 = arith.constant 0 : index
    %0 = vector.load %arg2[%c0, %c0_0] : memref<8x32xf32, #tpu.memory_space<vmem>>, vector<8x32xf32>
    %c0_1 = arith.constant 0 : index
    %c0_2 = arith.constant 0 : index
    %1 = vector.load %arg3[%c0_1, %c0_2] : memref<32x128xf32, #tpu.memory_space<vmem>>, vector<32x128xf32>
    %cst = arith.constant dense<0.000000e+00> : vector<8x128xf32>
    %2 = tpu.matmul %0, %1, %cst {dimension_numbers = #tpu.dot_dimension_numbers<[1], [0], [0], [1], [0, 0, 1, 1], [], []>} : vector<8x32xf32>, vector<32x128xf32>, vector<8x128xf32> -> vector<8x128xf32>
    %c0_3 = arith.constant 0 : index
    %c0_4 = arith.constant 0 : index
    %3 = vector.load %arg4[%c0_3, %c0_4] : memref<1x128xf32, #tpu.memory_space<vmem>>, vector<1x128xf32>
    %4 = vector.broadcast %3 : vector<1x128xf32> to vector<8x128xf32>
    %5 = arith.addf %2, %4 : vector<8x128xf32>
    %c0_5 = arith.constant 0 : index
    %c0_6 = arith.constant 0 : index
    %6 = vector.load %arg5[%c0_5, %c0_6] : memref<8x128xf32, #tpu.memory_space<vmem>>, vector<8x128xf32>
    tpu.vector_store %arg5[%c0_5, %c0_6], %5 {strides = array<i32>} : memref<8x128xf32, #tpu.memory_space<vmem>>, vector<8x128xf32>,
    return
  }
  func.func @transform_0(%arg0: i32, %arg1: i32) -> (i32, i32) {
    %c0_i32 = arith.constant 0 : i32
    %c0_i32_0 = arith.constant 0 : i32
    return %arg1, %c0_i32 : i32, i32
  }
  func.func @transform_1(%arg0: i32, %arg1: i32) -> (i32, i32) {
    %c0_i32 = arith.constant 0 : i32
    %c0_i32_0 = arith.constant 0 : i32
    return %c0_i32, %arg0 : i32, i32
  }
  func.func @transform_2(%arg0: i32, %arg1: i32) -> (i32, i32) {
    %c0_i32 = arith.constant 0 : i32
    %c0_i32_0 = arith.constant 0 : i32
    return %c0_i32, %arg0 : i32, i32
  }
  func.func @transform_3(%arg0: i32, %arg1: i32) -> (i32, i32) {
    %c0_i32 = arith.constant 0 : i32
    return %arg1, %arg0 : i32, i32
  }
}

</mosaic_0001>

<llo_original>
// kernel: tpu_custom_call.1
$region0: #{tpu_custom_call.1}
  #allocation0 [shape = 'u32[]', space=smem, size = 0x4, offset = 0x4, fixed_abs, tag = 'smem constant byte address 0x4 - core index']
  #allocation1 [shape = 'u32[144,128]{1,0:T(1,128)}', space=vmem, size = 0x12000, scoped, tag = 'internal scratch']
  %s0 = inlined_call_operand.hbm [shape: f32[8,32], index: 0, kind: input, shape index: {}]
  %s1 = inlined_call_operand.hbm [shape: f32[32,128], index: 1, kind: input, shape index: {}]
  %s2 = inlined_call_operand.vmem [shape: f32[1,128], index: 2, kind: input, shape index: {}]
  %s3 = inlined_call_operand.hbm [shape: f32[8,128], index: 3, kind: output, shape index: {}]
  %s4 = sld [smem:[#allocation0]]
  $region30: #{tpu_custom_call.1} parent=0
    _
  %s6 = ssub.s32 1, %s4
  %s7 = scalar_select 0, %s6, %s4
  $region1: #{tpu_custom_call.1} parent=0
    #allocation2 [shape = 'u8[4096]{0}', space=vmem, size = 0x1000, scoped, tag = 'input window, operand 0, single buffered']
    #allocation3 [shape = 's32[1]{0}', space=sflag, size = 0x4, scoped, tag = 'scoped memory for tpu_custom_call.1']
    #allocation4 [shape = 's32[1]{0}', space=sflag, size = 0x4, scoped, tag = 'scoped memory for tpu_custom_call.1']
    #allocation5 [shape = 'u8[16384]{0}', space=vmem, size = 0x4000, scoped, tag = 'input window, operand 1, single buffered']
    #allocation6 [shape = 's32[1]{0}', space=sflag, size = 0x4, scoped, tag = 'scoped memory for tpu_custom_call.1']
    #allocation7 [shape = 'u8[4096]{0}', space=vmem, size = 0x1000, scoped, tag = 'output window, operand 0, single buffered']
    %8 = vsyncpa [#allocation3], 0
    %9 = vsyncpa [#allocation6], 0
    %10 = vsyncpa [#allocation4], 0
    // Predicated region
    $region2: #{tpu_custom_call.1} parent=1 // pred_check
      _
    $region3: #{tpu_custom_call.1} parent=1 // pred_check_branch
      %12 = sbr.rel (0) target = $region5
    $region4: #{tpu_custom_call.1} parent=1 // pred_region
      %s14 = ssub.s32 128, 128
      %15 = vsyncadd [#allocation3], %s14
      %s17 = sshll.u32 [#allocation2], 4
      %s18 = int_to_ptr.vmem [resolvable:$true] %s17
      %20 = dma.hbm_to_vmem [thread:$0]  %s0, 128, %s18, [#allocation3]
    $region5: #{tpu_custom_call.1} parent=1 // pred_fallthru
      _
    // Predicated region
    $region6: #{tpu_custom_call.1} parent=1 // pred_check
      _
    $region7: #{tpu_custom_call.1} parent=1 // pred_check_branch
      %22 = sbr.rel (0) target = $region9
    $region8: #{tpu_custom_call.1} parent=1 // pred_region
      %s24 = ssub.s32 512, 512
      %25 = vsyncadd [#allocation6], %s24
      %s26 = sshll.u32 [#allocation5], 4
      %s27 = int_to_ptr.vmem [resolvable:$true] %s26
      %32 = dma.hbm_to_vmem [thread:$0]  %s1, 512, %s27, [#allocation6], 128, 128, 8
    $region9: #{tpu_custom_call.1} parent=1 // pred_fallthru
      _
    // Predicated region
    $region10: #{tpu_custom_call.1} parent=1 // pred_check
      _
    $region11: #{tpu_custom_call.1} parent=1 // pred_check_branch
      %34 = sbr.rel (0) target = $region13
    $region12: #{tpu_custom_call.1} parent=1 // pred_region
      _
    $region13: #{tpu_custom_call.1} parent=1 // pred_fallthru
      _
    // Predicated region
    $region14: #{tpu_custom_call.1} parent=1 // pred_check
      _
    $region15: #{tpu_custom_call.1} parent=1 // pred_check_branch
      %36 = sbr.rel (0) target = $region17
    $region16: #{tpu_custom_call.1} parent=1 // pred_region
      %37 = dma.done [#allocation3], 128
    $region17: #{tpu_custom_call.1} parent=1 // pred_fallthru
      _
    // Predicated region
    $region18: #{tpu_custom_call.1} parent=1 // pred_check
      _
    $region19: #{tpu_custom_call.1} parent=1 // pred_check_branch
      %39 = sbr.rel (0) target = $region21
    $region20: #{tpu_custom_call.1} parent=1 // pred_region
      %40 = dma.done [#allocation6], 512
    $region21: #{tpu_custom_call.1} parent=1 // pred_fallthru
      _
    %v41 = vld [vmem:[#allocation2] sm:$0xff]
    %v42 = vld [vmem:[#allocation5] sm:$0xff]
    %v43 = vld [vmem:[#allocation5 + $0x8] sm:$0xff]
    %v44 = vld [vmem:[#allocation5 + $0x10] sm:$0xff]
    %v45 = vld [vmem:[#allocation5 + $0x18] sm:$0xff]
    %v46 = vld [vmem:[%s2] sm:$0x1]
    %v48 = vlaneseq
    %v49 = vshrl.u32 %v48, 7
    %v50 = vsub.s32 0, %v49
    %v51 = vrot.slane %v46, %v50
    %vm53 = vcmask 261120
    %v55 = vsel %vm53, %v41, 0
    %57 = vmatprep.subr.mxu0 0.0
    %58 = vmatpush1.msra.mxu0 0.0
    %59 = vmatprep.subr.mxu0 0.0
    %60 = vmatpush1.msra.mxu0 0.0
    %61 = vmatprep.subr.mxu0 0.0
    %62 = vmatpush1.msra.mxu0 0.0
    %63 = vmatprep.subr.mxu0 0.0
    %64 = vmatpush1.msra.mxu0 0.0
    %65 = vmatprep.subr.mxu0 0.0
    %66 = vmatpush1.msra.mxu0 0.0
    %67 = vmatprep.subr.mxu0 0.0
    %68 = vmatpush1.msra.mxu0 0.0
    %69 = vmatprep.subr.mxu0 0.0
    %70 = vmatpush1.msra.mxu0 0.0
    %71 = vmatprep.subr.mxu0 0.0
    %72 = vmatpush1.msra.mxu0 0.0
    %73 = vmatprep.subr.mxu0 0.0
    %74 = vmatpush1.msra.mxu0 0.0
    %75 = vmatprep.subr.mxu0 0.0
    %76 = vmatpush1.msra.mxu0 0.0
    %77 = vmatprep.subr.mxu0 0.0
    %78 = vmatpush1.msra.mxu0 0.0
    %79 = vmatprep.subr.mxu0 0.0
    %80 = vmatpush1.msra.mxu0 0.0
    %81 = vmatprep.subr.mxu0 0.0
    %82 = vmatpush1.msra.mxu0 %v45
    %83 = vmatprep.subr.mxu0 0.0
    %84 = vmatpush1.msra.mxu0 %v44
    %85 = vmatprep.subr.mxu0 0.0
    %86 = vmatpush1.msra.mxu0 %v43
    %87 = vmatprep.subr.mxu0 0.0
    %88 = vmatpush1.msra.mxu0 %v42
    %89 = vmatprep.subr.mxu0 0.0
    %90 = vmatpush2.msra.mxu0 0.0
    %91 = vmatprep.subr.mxu0 0.0
    %92 = vmatpush2.msra.mxu0 0.0
    %93 = vmatprep.subr.mxu0 0.0
    %94 = vmatpush2.msra.mxu0 0.0
    %95 = vmatprep.subr.mxu0 0.0
    %96 = vmatpush2.msra.mxu0 0.0
    %97 = vmatprep.subr.mxu0 0.0
    %98 = vmatpush2.msra.mxu0 0.0
    %99 = vmatprep.subr.mxu0 0.0
    %100 = vmatpush2.msra.mxu0 0.0
    %101 = vmatprep.subr.mxu0 0.0
    %102 = vmatpush2.msra.mxu0 0.0
    %103 = vmatprep.subr.mxu0 0.0
    %104 = vmatpush2.msra.mxu0 0.0
    %105 = vmatprep.subr.mxu0 0.0
    %106 = vmatpush2.msra.mxu0 0.0
    %107 = vmatprep.subr.mxu0 0.0
    %108 = vmatpush2.msra.mxu0 0.0
    %109 = vmatprep.subr.mxu0 0.0
    %110 = vmatpush2.msra.mxu0 0.0
    %111 = vmatprep.subr.mxu0 0.0
    %112 = vmatpush2.msra.mxu0 0.0
    %113 = vmatprep.subr.mxu0 0.0
    %114 = vmatpush2.msra.mxu0 0.0
    %115 = vmatprep.subr.mxu0 0.0
    %116 = vmatpush2.msra.mxu0 0.0
    %117 = vmatprep.subr.mxu0 0.0
    %118 = vmatpush2.msra.mxu0 0.0
    %119 = vmatprep.subr.mxu0 0.0
    %120 = vmatpush2.msra.mxu0 0.0
    %121 = vmatprep.mubr.f32.mxu0 0.0
    %122 = vmatmul.mubr.f32.gmra.mxu0 %v55
    %v123 = vpop.f32.mrf.mxu0
    %v124 = vadd.f32 %v51, %v123
    %v125 = vpop.f32.mrf.mxu0
    %126 = vdwg.mxu0
    %127 = vst [vmem:[#allocation7] sm:$0xff] %v124
    // Predicated region
    $region22: #{tpu_custom_call.1} parent=1 // pred_check
      _
    $region23: #{tpu_custom_call.1} parent=1 // pred_check_branch
      %129 = sbr.rel (0) target = $region25
    $region24: #{tpu_custom_call.1} parent=1 // pred_region
      %s131 = ssub.s32 128, 128
      %132 = vsyncadd [#allocation4], %s131
      %s134 = sshll.u32 [#allocation7], 4
      %s135 = int_to_ptr.vmem [resolvable:$true] %s134
      %137 = dma.vmem_to_hbm [thread:$0]  %s135, 128, %s3, [#allocation4]
    $region25: #{tpu_custom_call.1} parent=1 // pred_fallthru
      _
    // Predicated region
    $region26: #{tpu_custom_call.1} parent=1 // pred_check
      _
    $region27: #{tpu_custom_call.1} parent=1 // pred_check_branch
      %139 = sbr.rel (0) target = $region29
    $region28: #{tpu_custom_call.1} parent=1 // pred_region
      %140 = dma.done [#allocation4], 128
    $region29: #{tpu_custom_call.1} parent=1 // pred_fallthru
      _
    %141 = vsyncpa [#allocation3], 1
    %142 = vsyncpa [#allocation6], 1
    %143 = vsyncpa [#allocation4], 1

// kernel: tpu_custom_call.1
$region0: #{tpu_custom_call.1}
  #allocation0 [shape = 'u32[]', space=smem, size = 0x4, offset = 0x4, fixed_abs, tag = 'smem constant byte address 0x4 - core index']
  #allocation1 [shape = 'u32[144,128]{1,0:T(1,128)}', space=vmem, size = 0x12000, scoped, tag = 'internal scratch']
  %s0 = inlined_call_operand.hbm [shape: f32[8,32], index: 0, kind: input, shape index: {}]
  %s1 = inlined_call_operand.hbm [shape: f32[32,128], index: 1, kind: input, shape index: {}]
  %s2 = inlined_call_operand.vmem [shape: f32[1,128], index: 2, kind: input, shape index: {}]
  %s3 = inlined_call_operand.hbm [shape: f32[8,128], index: 3, kind: output, shape index: {}]
  %s4 = sld [smem:[#allocation0]]
  $region30: #{tpu_custom_call.1} parent=0
    _
  %s6 = ssub.s32 1, %s4
  %s7 = scalar_select 0, %s6, %s4
  $region1: #{tpu_custom_call.1} parent=0
    #allocation2 [shape = 'u8[4096]{0}', space=vmem, size = 0x1000, scoped, tag = 'input window, operand 0, single buffered']
    #allocation3 [shape = 's32[1]{0}', space=sflag, size = 0x4, scoped, tag = 'scoped memory for tpu_custom_call.1']
    #allocation4 [shape = 's32[1]{0}', space=sflag, size = 0x4, scoped, tag = 'scoped memory for tpu_custom_call.1']
    #allocation5 [shape = 'u8[16384]{0}', space=vmem, size = 0x4000, scoped, tag = 'input window, operand 1, single buffered']
    #allocation6 [shape = 's32[1]{0}', space=sflag, size = 0x4, scoped, tag = 'scoped memory for tpu_custom_call.1']
    #allocation7 [shape = 'u8[4096]{0}', space=vmem, size = 0x1000, scoped, tag = 'output window, operand 0, single buffered']
    %8 = vsyncpa [#allocation3], 0
    %9 = vsyncpa [#allocation6], 0
    %10 = vsyncpa [#allocation4], 0
    // Predicated region
    $region2: #{tpu_custom_call.1} parent=1 // pred_check
      _
    $region3: #{tpu_custom_call.1} parent=1 // pred_check_branch
      %12 = sbr.rel (0) target = $region5
    $region4: #{tpu_custom_call.1} parent=1 // pred_region
      %s14 = ssub.s32 128, 128
      %15 = vsyncadd [#allocation3], %s14
      %s17 = sshll.u32 [#allocation2], 4
      %s18 = int_to_ptr.vmem [resolvable:$true] %s17
      %20 = dma.hbm_to_vmem [thread:$0]  %s0, 128, %s18, [#allocation3]
    $region5: #{tpu_custom_call.1} parent=1 // pred_fallthru
      _
    // Predicated region
    $region6: #{tpu_custom_call.1} parent=1 // pred_check
      _
    $region7: #{tpu_custom_call.1} parent=1 // pred_check_branch
      %22 = sbr.rel (0) target = $region9
    $region8: #{tpu_custom_call.1} parent=1 // pred_region
      %s24 = ssub.s32 512, 512
      %25 = vsyncadd [#allocation6], %s24
      %s26 = sshll.u32 [#allocation5], 4
      %s27 = int_to_ptr.vmem [resolvable:$true] %s26
      %32 = dma.hbm_to_vmem [thread:$0]  %s1, 512, %s27, [#allocation6], 128, 128, 8
    $region9: #{tpu_custom_call.1} parent=1 // pred_fallthru
      _
    // Predicated region
    $region10: #{tpu_custom_call.1} parent=1 // pred_check
      _
    $region11: #{tpu_custom_call.1} parent=1 // pred_check_branch
      %34 = sbr.rel (0) target = $region13
    $region12: #{tpu_custom_call.1} parent=1 // pred_region
      _
    $region13: #{tpu_custom_call.1} parent=1 // pred_fallthru
      _
    // Predicated region
    $region14: #{tpu_custom_call.1} parent=1 // pred_check
      _
    $region15: #{tpu_custom_call.1} parent=1 // pred_check_branch
      %36 = sbr.rel (0) target = $region17
    $region16: #{tpu_custom_call.1} parent=1 // pred_region
      %37 = dma.done [#allocation3], 128
    $region17: #{tpu_custom_call.1} parent=1 // pred_fallthru
      _
    // Predicated region
    $region18: #{tpu_custom_call.1} parent=1 // pred_check
      _
    $region19: #{tpu_custom_call.1} parent=1 // pred_check_branch
      %39 = sbr.rel (0) target = $region21
    $region20: #{tpu_custom_call.1} parent=1 // pred_region
      %40 = dma.done [#allocation6], 512
    $region21: #{tpu_custom_call.1} parent=1 // pred_fallthru
      _
    %v41 = vld [vmem:[#allocation2] sm:$0xff]
    %v42 = vld [vmem:[#allocation5] sm:$0xff]
    %v43 = vld [vmem:[#allocation5 + $0x8] sm:$0xff]
    %v44 = vld [vmem:[#allocation5 + $0x10] sm:$0xff]
    %v45 = vld [vmem:[#allocation5 + $0x18] sm:$0xff]
    %v46 = vld [vmem:[%s2] sm:$0x1]
    %v48 = vlaneseq
    %v49 = vshrl.u32 %v48, 7
    %v50 = vsub.s32 0, %v49
    %v51 = vrot.slane %v46, %v50
    %vm53 = vcmask 261120
    %v55 = vsel %vm53, %v41, 0
    %57 = vmatprep.subr.mxu0 0.0
    %58 = vmatpush1.msra.mxu0 0.0
    %59 = vmatprep.subr.mxu0 0.0
    %60 = vmatpush1.msra.mxu0 0.0
    %61 = vmatprep.subr.mxu0 0.0
    %62 = vmatpush1.msra.mxu0 0.0
    %63 = vmatprep.subr.mxu0 0.0
    %64 = vmatpush1.msra.mxu0 0.0
    %65 = vmatprep.subr.mxu0 0.0
    %66 = vmatpush1.msra.mxu0 0.0
    %67 = vmatprep.subr.mxu0 0.0
    %68 = vmatpush1.msra.mxu0 0.0
    %69 = vmatprep.subr.mxu0 0.0
    %70 = vmatpush1.msra.mxu0 0.0
    %71 = vmatprep.subr.mxu0 0.0
    %72 = vmatpush1.msra.mxu0 0.0
    %73 = vmatprep.subr.mxu0 0.0
    %74 = vmatpush1.msra.mxu0 0.0
    %75 = vmatprep.subr.mxu0 0.0
    %76 = vmatpush1.msra.mxu0 0.0
    %77 = vmatprep.subr.mxu0 0.0
    %78 = vmatpush1.msra.mxu0 0.0
    %79 = vmatprep.subr.mxu0 0.0
    %80 = vmatpush1.msra.mxu0 0.0
    %81 = vmatprep.subr.mxu0 0.0
    %82 = vmatpush1.msra.mxu0 %v45
    %83 = vmatprep.subr.mxu0 0.0
    %84 = vmatpush1.msra.mxu0 %v44
    %85 = vmatprep.subr.mxu0 0.0
    %86 = vmatpush1.msra.mxu0 %v43
    %87 = vmatprep.subr.mxu0 0.0
    %88 = vmatpush1.msra.mxu0 %v42
    %89 = vmatprep.subr.mxu0 0.0
    %90 = vmatpush2.msra.mxu0 0.0
    %91 = vmatprep.subr.mxu0 0.0
    %92 = vmatpush2.msra.mxu0 0.0
    %93 = vmatprep.subr.mxu0 0.0
    %94 = vmatpush2.msra.mxu0 0.0
    %95 = vmatprep.subr.mxu0 0.0
    %96 = vmatpush2.msra.mxu0 0.0
    %97 = vmatprep.subr.mxu0 0.0
    %98 = vmatpush2.msra.mxu0 0.0
    %99 = vmatprep.subr.mxu0 0.0
    %100 = vmatpush2.msra.mxu0 0.0
    %101 = vmatprep.subr.mxu0 0.0
    %102 = vmatpush2.msra.mxu0 0.0
    %103 = vmatprep.subr.mxu0 0.0
    %104 = vmatpush2.msra.mxu0 0.0
    %105 = vmatprep.subr.mxu0 0.0
    %106 = vmatpush2.msra.mxu0 0.0
    %107 = vmatprep.subr.mxu0 0.0
    %108 = vmatpush2.msra.mxu0 0.0
    %109 = vmatprep.subr.mxu0 0.0
    %110 = vmatpush2.msra.mxu0 0.0
    %111 = vmatprep.subr.mxu0 0.0
    %112 = vmatpush2.msra.mxu0 0.0
    %113 = vmatprep.subr.mxu0 0.0
    %114 = vmatpush2.msra.mxu0 0.0
    %115 = vmatprep.subr.mxu0 0.0
    %116 = vmatpush2.msra.mxu0 0.0
    %117 = vmatprep.subr.mxu0 0.0
    %118 = vmatpush2.msra.mxu0 0.0
    %119 = vmatprep.subr.mxu0 0.0
    %120 = vmatpush2.msra.mxu0 0.0
    %121 = vmatprep.mubr.f32.mxu0 0.0
    %122 = vmatmul.mubr.f32.gmra.mxu0 %v55
    %v123 = vpop.f32.mrf.mxu0
    %v124 = vadd.f32 %v51, %v123
    %v125 = vpop.f32.mrf.mxu0
    %126 = vdwg.mxu0
    %127 = vst [vmem:[#allocation7] sm:$0xff] %v124
    // Predicated region
    $region22: #{tpu_custom_call.1} parent=1 // pred_check
      _
    $region23: #{tpu_custom_call.1} parent=1 // pred_check_branch
      %129 = sbr.rel (0) target = $region25
    $region24: #{tpu_custom_call.1} parent=1 // pred_region
      %s131 = ssub.s32 128, 128
      %132 = vsyncadd [#allocation4], %s131
      %s134 = sshll.u32 [#allocation7], 4
      %s135 = int_to_ptr.vmem [resolvable:$true] %s134
      %137 = dma.vmem_to_hbm [thread:$0]  %s135, 128, %s3, [#allocation4]
    $region25: #{tpu_custom_call.1} parent=1 // pred_fallthru
      _
    // Predicated region
    $region26: #{tpu_custom_call.1} parent=1 // pred_check
      _
    $region27: #{tpu_custom_call.1} parent=1 // pred_check_branch
      %139 = sbr.rel (0) target = $region29
    $region28: #{tpu_custom_call.1} parent=1 // pred_region
      %140 = dma.done [#allocation4], 128
    $region29: #{tpu_custom_call.1} parent=1 // pred_fallthru
      _
    %141 = vsyncpa [#allocation3], 1
    %142 = vsyncpa [#allocation6], 1
    %143 = vsyncpa [#allocation4], 1

</llo_original>
